<compile_context>
chip_gen: v7x
topology: tpu7x:2x2x1
jax: 0.10.0
libtpu: 0.0.40
codegen_flags: <defaults>
</compile_context>

<pallas_src>
import math

import jax
import jax.numpy as jnp
from jax.experimental import pallas as pl
from jax.experimental.pallas import tpu as pltpu

_LANE = 128


def _cdiv(a, b):
    return -(-a // b)


def _sublane(dtype) -> int:
    # second-minor tiling: 8 rows for 4-byte dtypes, 16 for 2-byte, 32 for 1-byte
    return max(8, 32 // jnp.dtype(dtype).itemsize)


def make_sinusoidal_pe(d_pos: int, max_seq_length: int) -> jnp.ndarray:
    """Matches PositionalEncoding._init_sinusoidal_pe (even idx = sin, odd idx = cos)."""
    position = jnp.arange(max_seq_length, dtype=jnp.float32)[:, None]           # (L, 1)
    div_term = jnp.exp(jnp.arange(0, d_pos, 2, dtype=jnp.float32)
                       * (-math.log(10000.0) / d_pos))                          # (d_pos/2,)
    ang = position * div_term                                                   # (L, d_pos/2)
    pe = jnp.stack([jnp.sin(ang), jnp.cos(ang)], axis=-1)                       # (L, d_pos/2, 2)
    return pe.reshape(max_seq_length, d_pos)


def _pe_add_kernel(x_ref, pe_ref, o_ref):
    # x_ref/o_ref: (tB, tS, Wf);  pe_ref: (tS, Wf) pre-scaled, pre-cast, zero-padded.
    o_ref[...] = x_ref[...] + pe_ref[...][None, :, :]


def _feature_window(d_start, d_end, D, allow_in_place):
    """Minimal lane(128)-aligned cover of [d_start, d_end) inside [0, D).

    Returns (w_lo, W, use_window). Falls back to streaming the full feature dim when the
    aligned cover would overrun an unaligned D tail, when it already spans all of D, or
    when in-place aliasing is disabled by the caller."""
    a_lo = (d_start // _LANE) * _LANE
    a_hi = _cdiv(d_end, _LANE) * _LANE
    W = a_hi - a_lo
    if (not allow_in_place) or a_hi > D or (a_lo == 0 and W >= D):
        return 0, D, False
    return a_lo, W, True


def prepare_pe(pe, magnitude, *, seq_len, d_start_idx, d_model, dtype, allow_in_place=True):
    """Pre-scale (magnitude), cast to x.dtype and zero-pad the PE to the lane-aligned
    feature window once.  This is static for a fixed module + sequence length, so cache
    the result in the caller instead of rebuilding it every forward."""
    L, d_pos = pe.shape
    d_end_idx = d_start_idx + d_pos
    assert d_start_idx >= 0
    assert seq_len <= L, "sequence length exceeds max_seq_length"
    assert d_end_idx <= d_model, "d_end_idx must be <= x.shape[-1]"

    w_lo, W, use_window = _feature_window(d_start_idx, d_end_idx, d_model, allow_in_place)

    pe_s = pe[:seq_len].astype(jnp.float32)
    if magnitude is not None:
        pe_s = pe_s * magnitude.astype(jnp.float32)
    pe_s = pe_s.astype(dtype)  # module casts PE to x.dtype before the add
    pe_pad = jnp.zeros((seq_len, W), dtype).at[:, d_start_idx - w_lo:d_end_idx - w_lo].set(pe_s)
    return pe_pad, (w_lo, W, use_window)


def pe_add(x, pe_pad, window, *,
           vmem_block_budget=16 * 1024 * 1024,     # conservative for v7x (64 MiB VMEM);
           vmem_limit_bytes=48 * 1024 * 1024,      # raise on v5e/v6e for very wide D
           min_parallel_steps=2):
    """out = x with pe_pad added (broadcast over batch) on the feature window `window`."""
    B, S, D = x.shape
    w_lo, W, use_window = window
    assert pe_pad.shape == (S, W) and pe_pad.dtype == x.dtype

    itemsize = jnp.dtype(x.dtype).itemsize
    sub = _sublane(x.dtype)

    # Feature blocks of width Wf (a multiple of 128 dividing both w_lo and W) so the
    # window offset is expressible with plain Blocked indexing on a feature grid axis.
    Wf = math.gcd(w_lo, W) if use_window else W
    nF = W // Wf
    f_base = w_lo // Wf

    # --- (tB, tS) sized against a VMEM budget (double-buffered x-in + out + pe) ---
    def step_bytes(tB, tS):
        return 2 * (2 * tB + 1) * tS * Wf * itemsize

    if step_bytes(1, S) <= vmem_block_budget:
        tS = S
        max_tB = (vmem_block_budget // (2 * tS * Wf * itemsize) - 1) // 2
        tB = int(max(1, min(B, max_tB)))
    else:
        tB = 1
        max_rows = vmem_block_budget // (6 * Wf * itemsize)
        tS = int(min(S, max(sub, (max_rows // sub) * sub)))

    nB = _cdiv(B, tB)
    nS = _cdiv(S, tS)

    # v7x megacore: expose >= 2 parallel grid steps so both TensorCores get work.
    if nB * nS * nF < min_parallel_steps:
        if tS == S and S >= 2 * sub:
            tS = max(sub, ((S // 2) // sub) * sub)
            nS = _cdiv(S, tS)
        elif B >= 2:
            tB = _cdiv(B, 2)
            nB = _cdiv(B, tB)

    # Grid order (nS, nF, nB): batch innermost => PE block index unchanged between
    # consecutive steps => Pallas skips its re-DMA (PE effectively VMEM-resident).
    x_spec = pl.BlockSpec((tB, tS, Wf), lambda s, f, b: (b, s, f_base + f))
    pe_spec = pl.BlockSpec((tS, Wf), lambda s, f, b: (s, f))

    return pl.pallas_call(
        _pe_add_kernel,
        out_shape=jax.ShapeDtypeStruct((B, S, D), x.dtype),
        grid=(nS, nF, nB),
        in_specs=[x_spec, pe_spec],
        out_specs=x_spec,
        # Window path: features outside [w_lo, w_lo+W) are never read or rewritten,
        # the output aliases x's buffer so they keep their values.  NOTE: the caller
        # should let x be donatable, otherwise XLA inserts a defensive copy.
        input_output_aliases={0: 0} if use_window else {},
        compiler_params=pltpu.CompilerParams(
            dimension_semantics=("parallel", "parallel", "parallel"),
            vmem_limit_bytes=vmem_limit_bytes,
        ),
        cost_estimate=pl.CostEstimate(
            flops=B * S * W,
            transcendentals=0,
            bytes_accessed=(2 * B * S * W + S * W) * itemsize,   # PE read once (resident)
        ),
    )(x, pe_pad)


def positional_encoding_forward(x, pe, magnitude=None, *, d_start_idx=0, seq_dim=1,
                                allow_in_place=True, **kwargs):
    """x: (B, S, D); pe: (L, d_pos); magnitude: (1, d_pos) or None.  seq_dim must be 1."""
    assert seq_dim == 1, "kernel assumes (B, S, D) layout with seq_dim = 1"
    B, S, D = x.shape
    pe_pad, window = prepare_pe(pe, magnitude, seq_len=S, d_start_idx=d_start_idx,
                                d_model=D, dtype=x.dtype, allow_in_place=allow_in_place)
    return pe_add(x, pe_pad, window, **kwargs)


if __name__ == "__main__":
    key = jax.random.PRNGKey(0)
    k1, k2, k3 = jax.random.split(key, 3)

    # --- Test 1: PE covers whole (small, unaligned) feature dim -> full-D streaming path
    B, S, D = 2, 8, 32
    d_pos, d_start, max_len = 32, 0, 16
    x = jax.random.normal(k1, (B, S, D), dtype=jnp.float32)
    pe = make_sinusoidal_pe(d_pos, max_len)
    magnitude = jnp.ones((1, d_pos), jnp.float32) * 1.0          # init_magnitute = 1.0
    ref = x.at[..., d_start:d_start + d_pos].add((pe[:S] * magnitude).astype(x.dtype)[None])

    out = positional_encoding_forward(x, pe, magnitude, d_start_idx=d_start)
    out = jax.block_until_ready(out)
    assert jnp.allclose(out, ref, atol=1e-6), "mismatch vs reference (test 1)"

    # --- Test 2: d_pos << D, unaligned d_start -> minimal 256-wide aligned window,
    #     2 feature blocks of 128, x->out aliasing (scalable_sinusoidal)
    B2, S2, D2 = 2, 16, 512
    d_pos2, d_start2, max_len2 = 128, 130, 32
    x2 = jax.random.normal(k2, (B2, S2, D2), dtype=jnp.float32)
    pe2 = make_sinusoidal_pe(d_pos2, max_len2)
    mag2 = jnp.ones((1, d_pos2), jnp.float32) * 0.5
    ref2 = x2.at[..., d_start2:d_start2 + d_pos2].add((pe2[:S2] * mag2).astype(x2.dtype)[None])

    out2 = positional_encoding_forward(x2, pe2, mag2, d_start_idx=d_start2)
    out2 = jax.block_until_ready(out2)
    assert jnp.allclose(out2, ref2, atol=1e-6), "mismatch vs reference (test 2)"

    # --- Test 3: aligned window at feature start ('sinusoidal', no magnitude), batch in
    #     block + v7x >=2-step split of the sequence axis
    B3, S3, D3 = 4, 16, 256
    d_pos3, d_start3, max_len3 = 128, 0, 32
    x3 = jax.random.normal(k3, (B3, S3, D3), dtype=jnp.float32)
    pe3 = make_sinusoidal_pe(d_pos3, max_len3)
    ref3 = x3.at[..., d_start3:d_start3 + d_pos3].add(pe3[:S3].astype(x3.dtype)[None])

    out3 = positional_encoding_forward(x3, pe3, None, d_start_idx=d_start3)
    out3 = jax.block_until_ready(out3)
    assert jnp.allclose(out3, ref3, atol=1e-6), "mismatch vs reference (test 3)"

    print("KERNEL_OK")
</pallas_src>

<mosaic_0001>
module attributes {stable_mosaic.version = 11 : i64} {
  func.func @_pe_add_kernel(%arg0: i32, %arg1: i32, %arg2: i32, %arg3: memref<1x8x32xf32, #tpu.memory_space<vmem>>, %arg4: memref<8x32xf32, #tpu.memory_space<vmem>>, %arg5: memref<1x8x32xf32, #tpu.memory_space<vmem>>) attributes {dimension_semantics = [#tpu.dimension_semantics<parallel>, #tpu.dimension_semantics<parallel>, #tpu.dimension_semantics<parallel>], iteration_bounds = array<i64: 1, 1, 2>, scalar_prefetch = 0 : i64, scratch_operands = 0 : i64, tpu.core_type = #tpu.core_type<tc>, window_params = [{transform_indices = @transform_0, window_bounds = array<i64: 1, 8, 32>}, {transform_indices = @transform_1, window_bounds = array<i64: 8, 32>}, {transform_indices = @transform_2, window_bounds = array<i64: 1, 8, 32>}]} {
    %c0 = arith.constant 0 : index
    %c0_0 = arith.constant 0 : index
    %c0_1 = arith.constant 0 : index
    %0 = vector.load %arg3[%c0, %c0_0, %c0_1] : memref<1x8x32xf32, #tpu.memory_space<vmem>>, vector<1x8x32xf32>
    %c0_2 = arith.constant 0 : index
    %c0_3 = arith.constant 0 : index
    %1 = vector.load %arg4[%c0_2, %c0_3] : memref<8x32xf32, #tpu.memory_space<vmem>>, vector<8x32xf32>
    %2 = vector.shape_cast %1 : vector<8x32xf32> to vector<1x8x32xf32>
    %3 = arith.addf %0, %2 : vector<1x8x32xf32>
    %c0_4 = arith.constant 0 : index
    %c0_5 = arith.constant 0 : index
    %c0_6 = arith.constant 0 : index
    %4 = vector.load %arg5[%c0_4, %c0_5, %c0_6] : memref<1x8x32xf32, #tpu.memory_space<vmem>>, vector<1x8x32xf32>
    tpu.vector_store %arg5[%c0_4, %c0_5, %c0_6], %3 {strides = array<i32>} : memref<1x8x32xf32, #tpu.memory_space<vmem>>, vector<1x8x32xf32>,
    return
  }
  func.func @transform_0(%arg0: i32, %arg1: i32, %arg2: i32) -> (i32, i32, i32) {
    %c0_i32 = arith.constant 0 : i32
    %0 = arith.addi %c0_i32, %arg1 : i32
    %c0_i32_0 = arith.constant 0 : i32
    return %arg2, %arg0, %0 : i32, i32, i32
  }
  func.func @transform_1(%arg0: i32, %arg1: i32, %arg2: i32) -> (i32, i32) {
    %c0_i32 = arith.constant 0 : i32
    return %arg0, %arg1 : i32, i32
  }
  func.func @transform_2(%arg0: i32, %arg1: i32, %arg2: i32) -> (i32, i32, i32) {
    %c0_i32 = arith.constant 0 : i32
    %0 = arith.addi %c0_i32, %arg1 : i32
    %c0_i32_0 = arith.constant 0 : i32
    return %arg2, %arg0, %0 : i32, i32, i32
  }
}

</mosaic_0001>

<llo_original>
// kernel: tpu_custom_call.1
$region0: #{tpu_custom_call.1}
  #allocation0 [shape = 'u32[]', space=smem, size = 0x4, offset = 0x4, fixed_abs, tag = 'smem constant byte address 0x4 - core index']
  #allocation1 [shape = 'u32[144,128]{1,0:T(1,128)}', space=vmem, size = 0x12000, scoped, tag = 'internal scratch']
  %s0 = inlined_call_operand.hbm [shape: f32[2,8,32], index: 0, kind: input, shape index: {}]
  %s1 = inlined_call_operand.hbm [shape: f32[8,32], index: 1, kind: input, shape index: {}]
  %s2 = inlined_call_operand.hbm [shape: f32[2,8,32], index: 2, kind: output, shape index: {}]
  %s3 = sld [smem:[#allocation0]]
  $region49: #{tpu_custom_call.1} parent=0
    _
  %s5 = ssub.s32 1, %s3
  %s6 = scalar_select 0, %s5, %s3
  $region1: #{tpu_custom_call.1} parent=0
    #allocation2 [shape = 'u8[8192]{0}', space=vmem, size = 0x2000, scoped, tag = 'input window, operand 0']
    #allocation3 [shape = 's32[2]{0}', space=sflag, size = 0x8, scoped, tag = 'scoped memory for tpu_custom_call.1']
    #allocation4 [shape = 's32[2]{0}', space=sflag, size = 0x8, scoped, tag = 'scoped memory for tpu_custom_call.1']
    #allocation5 [shape = 'u8[4096]{0}', space=vmem, size = 0x1000, scoped, tag = 'input window, operand 1, single buffered']
    #allocation6 [shape = 's32[1]{0}', space=sflag, size = 0x4, scoped, tag = 'scoped memory for tpu_custom_call.1']
    #allocation7 [shape = 'u8[8192]{0}', space=vmem, size = 0x2000, scoped, tag = 'output window, operand 0']
    %7 = vsyncpa [#allocation3], 0
    %s8 = scalar_lea.sflag [#allocation3], 1
    %9 = vsyncpa %s8, 0
    %10 = vsyncpa [#allocation6], 0
    %11 = vsyncpa [#allocation4], 0
    %s12 = scalar_lea.sflag [#allocation4], 1
    %13 = vsyncpa %s12, 0
    loop: start=0, step=1, limit=4
    $region2: #{tpu_custom_call.1} parent=1 // loop_pre_header
      _
    $region3: #{tpu_custom_call.1} parent=1 // loop_header
      %s15 = sphi 0, %s19
      %p16 = scmp.ge.s32.totalorder %s15, 4
      %s22 = sphi 0, %s41
      %s23 = sphi 0, %s37
      %s24 = sphi 0, %s33
      %s25 = sphi 0, %s22
      %s26 = sphi 0, %s23
      %s27 = sphi 0, %s24
      %s28 = sphi 0, %s25
      %s29 = sphi 0, %s26
      %s30 = sphi 0, %s27
      %s48 = sphi 0, %s50
      %s51 = sphi 0, %s48
      %s52 = sphi 0, %s51
      %s68 = sphi 0, %s52
      %s76 = sphi 0, %s78
      %s79 = sphi 0, %s76
      %s80 = sphi 0, %s79
      %s96 = sphi 0, %s80
      %s106 = sphi 0, %s108
      %s109 = sphi 0, %s106
      %s110 = sphi 0, %s109
      %s126 = sphi 0, %s110
    $region4: #{tpu_custom_call.1} parent=1 // loop_header_branch
      %18 = sbr.rel (%p16) target = $region8
    $region5: #{tpu_custom_call.1} parent=1 // loop_body
      %s20 = ssub.s32 %s15, 1
      %s21 = ssub.s32 %s15, 2
      %s31 = sadd.s32 1, %s24
      %p32 = scmp.ge.s32.totalorder %s31, 2
      %s33 = scalar_select %p32, 0, %s31
      %s34 = sadd.s32 1, %s23
      %s35 = scalar_select %p32, %s34, %s23
      %p36 = scmp.ge.s32.totalorder %s35, 1
      %s37 = scalar_select %p36, 0, %s35
      %s38 = sadd.s32 1, %s22
      %s39 = scalar_select %p36, %s38, %s22
      %p40 = scmp.ge.s32.totalorder %s39, 1
      %s41 = scalar_select %p40, 0, %s39
      %s42 = ssub.s32 %s24, %s33
      %s43 = ssub.s32 %s22, %s41
      %s44 = sor.u32 %s42, %s43
      %s45 = ssub.s32 %s23, %s37
      %s46 = sor.u32 %s44, %s45
      %p47 = scmp.eq.s32.totalorder %s46, 0
      %s49 = sadd.s32 %s48, 1
      %s50 = scalar_select %p47, %s48, %s49
      %p53 = pneg %p47
      %p54 = scmp.eq.s32.totalorder %s15, 1
      %p55 = por %p53, %p54
      %p56 = scmp.ne.s32.totalorder %s48, %s51
      %p57 = scmp.eq.s32.totalorder %s15, 0
      %p58 = por %p56, %p57
      %p59 = scmp.ne.s32.totalorder %s48, %s51
      %p60 = scmp.eq.s32.totalorder %s20, 1
      %p61 = por %p59, %p60
      %p62 = scmp.ne.s32.totalorder %s51, %s52
      %p63 = scmp.eq.s32.totalorder %s20, 0
      %p64 = por %p62, %p63
      %p65 = scmp.ne.s32.totalorder %s51, %s52
      %p66 = scmp.eq.s32.totalorder %s21, 1
      %p67 = por %p65, %p66
      %p69 = scmp.ne.s32.totalorder %s52, %s68
      %p70 = scmp.eq.s32.totalorder %s21, 0
      %p71 = por %p69, %p70
      %s72 = ssub.s32 %s22, %s41
      %s73 = ssub.s32 %s23, %s37
      %s74 = sor.u32 %s72, %s73
      %p75 = scmp.eq.s32.totalorder %s74, 0
      %s77 = sadd.s32 %s76, 1
      %s78 = scalar_select %p75, %s76, %s77
      %p81 = pneg %p75
      %p82 = scmp.eq.s32.totalorder %s15, 1
      %p83 = por %p81, %p82
      %p84 = scmp.ne.s32.totalorder %s76, %s79
      %p85 = scmp.eq.s32.totalorder %s15, 0
      %p86 = por %p84, %p85
      %p87 = scmp.ne.s32.totalorder %s76, %s79
      %p88 = scmp.eq.s32.totalorder %s20, 1
      %p89 = por %p87, %p88
      %p90 = scmp.ne.s32.totalorder %s79, %s80
      %p91 = scmp.eq.s32.totalorder %s20, 0
      %p92 = por %p90, %p91
      %p93 = scmp.ne.s32.totalorder %s79, %s80
      %p94 = scmp.eq.s32.totalorder %s21, 1
      %p95 = por %p93, %p94
      %p97 = scmp.ne.s32.totalorder %s80, %s96
      %p98 = scmp.eq.s32.totalorder %s21, 0
      %p99 = por %p97, %p98
      %s100 = ssub.s32 %s24, %s33
      %s101 = ssub.s32 %s22, %s41
      %s102 = sor.u32 %s100, %s101
      %s103 = ssub.s32 %s23, %s37
      %s104 = sor.u32 %s102, %s103
      %p105 = scmp.eq.s32.totalorder %s104, 0
      %s107 = sadd.s32 %s106, 1
      %s108 = scalar_select %p105, %s106, %s107
      %p111 = pneg %p105
      %p112 = scmp.eq.s32.totalorder %s15, 1
      %p113 = por %p111, %p112
      %p114 = scmp.ne.s32.totalorder %s106, %s109
      %p115 = scmp.eq.s32.totalorder %s15, 0
      %p116 = por %p114, %p115
      %p117 = scmp.ne.s32.totalorder %s106, %s109
      %p118 = scmp.eq.s32.totalorder %s20, 1
      %p119 = por %p117, %p118
      %p120 = scmp.ne.s32.totalorder %s109, %s110
      %p121 = scmp.eq.s32.totalorder %s20, 0
      %p122 = por %p120, %p121
      %p123 = scmp.ne.s32.totalorder %s109, %s110
      %p124 = scmp.eq.s32.totalorder %s21, 1
      %p125 = por %p123, %p124
      %p127 = scmp.ne.s32.totalorder %s110, %s126
      %p128 = scmp.eq.s32.totalorder %s21, 0
      %p129 = por %p127, %p128
      %p130 = scmp.le.s32.totalorder 1, %s15
      %p131 = scmp.lt.s32.totalorder %s15, 3
      %p132 = pnand %p130, %p131
      %p133 = pneg %p132
      // Predicated region
      $region9: #{tpu_custom_call.1} parent=5 // pred_check
        _
      $region10: #{tpu_custom_call.1} parent=5 // pred_check_branch
        %135 = sbr.rel (%p132) target = $region12
      $region11: #{tpu_custom_call.1} parent=5 // pred_region
        %s136 = ssub.s32 %s15, 1
        // Predicated region
        $region13: #{tpu_custom_call.1} parent=11 // pred_check
          %p137 = pneg %p92
        $region14: #{tpu_custom_call.1} parent=11 // pred_check_branch
          %139 = sbr.rel (%p137) target = $region16
        $region15: #{tpu_custom_call.1} parent=11 // pred_region
          %s141 = ssub.s32 128, 128
          %142 = vsyncadd [#allocation6], %s141
          %s143 = sadd.s32 %s26, %s25
          %s144 = smul.addr %s143, 128
          %s145 = scalar_lea.hbm %s1, %s144
          %s147 = sshll.u32 [#allocation5], 4
          %s148 = int_to_ptr.vmem [resolvable:$true] %s147
          %150 = dma.hbm_to_vmem [thread:$0]  %s145, 128, %s148, [#allocation6]
        $region16: #{tpu_custom_call.1} parent=11 // pred_fallthru
          _
      $region12: #{tpu_custom_call.1} parent=5 // pred_fallthru
        _
      %p151 = scmp.lt.s32.totalorder %s15, 2
      // Predicated region
      $region17: #{tpu_custom_call.1} parent=5 // pred_check
        %p152 = pneg %p151
      $region18: #{tpu_custom_call.1} parent=5 // pred_check_branch
        %154 = sbr.rel (%p152) target = $region20
      $region19: #{tpu_custom_call.1} parent=5 // pred_region
        // Predicated region
        $region21: #{tpu_custom_call.1} parent=19 // pred_check
          %p155 = pneg %p58
        $region22: #{tpu_custom_call.1} parent=19 // pred_check_branch
          %157 = sbr.rel (%p155) target = $region24
        $region23: #{tpu_custom_call.1} parent=19 // pred_region
          %s158 = sand.u32 %s48, 1
          %s159 = scalar_lea.sflag [#allocation3], %s158
          %s160 = sand.u32 %s48, 1
          %s161 = smul.addr %s160, 8
          %s162 = scalar_lea.vmem [#allocation2], %s161
          %s164 = ssub.s32 128, 128
          %165 = vsyncadd %s159, %s164
          %s166 = sadd.s32 %s23, %s22
          %s167 = sadd.s32 %s166, %s24
          %s168 = smul.addr %s167, 128
          %s169 = scalar_lea.hbm %s0, %s168
          %s171 = sshll.u32 %s162, 4
          %s172 = int_to_ptr.vmem [resolvable:$true] %s171
          %174 = dma.hbm_to_vmem [thread:$0]  %s169, 128, %s172, %s159
        $region24: #{tpu_custom_call.1} parent=19 // pred_fallthru
          _
      $region20: #{tpu_custom_call.1} parent=5 // pred_fallthru
        _
      %p175 = scmp.le.s32.totalorder 1, %s15
      %p176 = scmp.lt.s32.totalorder %s15, 3
      %p177 = pnand %p175, %p176
      %p178 = pneg %p177
      // Predicated region
      $region25: #{tpu_custom_call.1} parent=5 // pred_check
        _
      $region26: #{tpu_custom_call.1} parent=5 // pred_check_branch
        %180 = sbr.rel (%p177) target = $region28
      $region27: #{tpu_custom_call.1} parent=5 // pred_region
        %s181 = ssub.s32 %s15, 1
        %s182 = sand.u32 %s51, 1
        %s183 = scalar_lea.sflag [#allocation3], %s182
        %s184 = sand.u32 %s51, 1
        %s185 = smul.addr %s184, 8
        %s186 = scalar_lea.vmem [#allocation2], %s185
        // Predicated region
        $region29: #{tpu_custom_call.1} parent=27 // pred_check
          %p187 = pneg %p64
        $region30: #{tpu_custom_call.1} parent=27 // pred_check_branch
          %189 = sbr.rel (%p187) target = $region32
        $region31: #{tpu_custom_call.1} parent=27 // pred_region
          %190 = dma.done %s183, 128
        $region32: #{tpu_custom_call.1} parent=27 // pred_fallthru
          _
        // Predicated region
        $region33: #{tpu_custom_call.1} parent=27 // pred_check
          %p191 = pneg %p92
        $region34: #{tpu_custom_call.1} parent=27 // pred_check_branch
          %193 = sbr.rel (%p191) target = $region36
        $region35: #{tpu_custom_call.1} parent=27 // pred_region
          %194 = dma.done [#allocation6], 128
        $region36: #{tpu_custom_call.1} parent=27 // pred_fallthru
          _
        %s195 = sand.u32 %s51, 1
        %s196 = scalar_lea.sflag [#allocation3], %s195
        %s197 = sand.u32 %s51, 1
        %s198 = smul.addr %s197, 8
        %s199 = scalar_lea.vmem [#allocation2], %s198
        %p200 = pneg %p64
        %p201 = pneg %p61
        %p202 = pneg %p92
        %p203 = pneg %p89
        %p204 = pneg %p122
        %p205 = pneg %p119
        %s206 = sand.u32 %s109, 1
        %s207 = scalar_lea.sflag [#allocation4], %s206
        %s208 = sand.u32 %s109, 1
        %s209 = smul.addr %s208, 8
        %s210 = scalar_lea.vmem [#allocation7], %s209
        %v211 = vld [vmem:[%s186] sm:$0xff]
        %v212 = vld [vmem:[#allocation5] sm:$0xff]
        %v213 = vadd.f32 %v211, %v212
        %vm214 = vcmask 261120
        %215 = vst.msk [vmem:[%s210] sm:$0xff] %vm214, %v213
        %s216 = sand.u32 %s109, 1
        %s217 = scalar_lea.sflag [#allocation4], %s216
        %s218 = sand.u32 %s109, 1
        %s219 = smul.addr %s218, 8
        %s220 = scalar_lea.vmem [#allocation7], %s219
        // Predicated region
        $region37: #{tpu_custom_call.1} parent=27 // pred_check
          %p221 = pneg %p119
        $region38: #{tpu_custom_call.1} parent=27 // pred_check_branch
          %223 = sbr.rel (%p221) target = $region40
        $region39: #{tpu_custom_call.1} parent=27 // pred_region
          %s225 = ssub.s32 128, 128
          %226 = vsyncadd %s217, %s225
          %s227 = sadd.s32 %s26, %s25
          %s228 = sadd.s32 %s227, %s27
          %s229 = smul.addr %s228, 128
          %s230 = scalar_lea.hbm %s2, %s229
          %s232 = sshll.u32 %s220, 4
          %s233 = int_to_ptr.vmem [resolvable:$true] %s232
          %235 = dma.vmem_to_hbm [thread:$0]  %s233, 128, %s230, %s217
        $region40: #{tpu_custom_call.1} parent=27 // pred_fallthru
          _
      $region28: #{tpu_custom_call.1} parent=5 // pred_fallthru
        _
      %p236 = scmp.le.s32.totalorder 2, %s15
      // Predicated region
      $region41: #{tpu_custom_call.1} parent=5 // pred_check
        %p237 = pneg %p236
      $region42: #{tpu_custom_call.1} parent=5 // pred_check_branch
        %239 = sbr.rel (%p237) target = $region44
      $region43: #{tpu_custom_call.1} parent=5 // pred_region
        %s240 = ssub.s32 %s15, 2
        // Predicated region
        $region45: #{tpu_custom_call.1} parent=43 // pred_check
          %p241 = pneg %p125
        $region46: #{tpu_custom_call.1} parent=43 // pred_check_branch
          %243 = sbr.rel (%p241) target = $region48
        $region47: #{tpu_custom_call.1} parent=43 // pred_region
          %s244 = sand.u32 %s110, 1
          %s245 = scalar_lea.sflag [#allocation4], %s244
          %s246 = sand.u32 %s110, 1
          %s247 = smul.addr %s246, 8
          %s248 = scalar_lea.vmem [#allocation7], %s247
          %249 = dma.done %s245, 128
        $region48: #{tpu_custom_call.1} parent=43 // pred_fallthru
          _
      $region44: #{tpu_custom_call.1} parent=5 // pred_fallthru
        _
    $region6: #{tpu_custom_call.1} parent=1 // loop_footer
      %s19 = sadd.s32 1, %s15
    $region7: #{tpu_custom_call.1} parent=1 // loop_footer_branch
      %14 = sbr.rel target = $region3
    $region8: #{tpu_custom_call.1} parent=1 // loop_exit
      _
    %250 = vsyncpa [#allocation3], 1
    %s251 = scalar_lea.sflag [#allocation3], 1
    %252 = vsyncpa %s251, 1
    %253 = vsyncpa [#allocation6], 1
    %254 = vsyncpa [#allocation4], 1
    %s255 = scalar_lea.sflag [#allocation4], 1
    %256 = vsyncpa %s255, 1

</llo_original>
